<compile_context>
chip_gen: v7x
topology: tpu7x:2x2x1
jax: 0.10.0
libtpu: 0.0.40
codegen_flags: <defaults>
</compile_context>

<pallas_src>
import functools

import jax
import jax.numpy as jnp
from jax.experimental import pallas as pl
from jax.experimental.pallas import tpu as pltpu

_EPS = 1e-5
_LANES = 128
_VMEM_LIMIT = 32 * 1024 * 1024          # legal scoped VMEM on v5e/v6e/v7x


def _default_block_rows():
    """Bigger blocks on v7x (3x HBM BW) to amortize per-grid-step overhead."""
    try:
        kind = jax.devices()[0].device_kind.lower()
    except Exception:
        return 4096
    if "v7" in kind or "tpu7" in kind:
        return 8192                      # 4 MiB/input/step f32; 24 MiB elementwise 2-buf
    return 4096                          # 2 MiB/input/step f32


_BLOCK_ROWS = _default_block_rows()


def _rel_l1_sum_kernel(x_ref, y_ref, o_ref, acc_ref, *,
                       block_rows, blocks_per_split, total_rows, may_mask):
    """Per-split partial sum of |x-y|/(|x|+eps) into a (1,128) lane vector."""
    i = pl.program_id(1)

    @pl.when(i == 0)
    def _():
        acc_ref[...] = jnp.zeros_like(acc_ref)

    x = x_ref[...].astype(jnp.float32)
    y = y_ref[...].astype(jnp.float32)
    d = jnp.abs(x - y) / (jnp.abs(x) + _EPS)

    if may_mask:
        # Only the block that straddles total_rows (or a clamped duplicate
        # block of an overhanging split) pays the mask; interior blocks take
        # the unmasked fast path.
        s = pl.program_id(0)
        row0 = (s * blocks_per_split + i) * block_rows
        straddles = row0 + block_rows > total_rows

        @pl.when(straddles)
        def _():
            rid = row0 + jax.lax.broadcasted_iota(jnp.int32, d.shape, 0)
            dm = jnp.where(rid < total_rows, d, 0.0)
            acc_ref[...] += jnp.sum(dm, axis=0, keepdims=True)

        @pl.when(jnp.logical_not(straddles))
        def _():
            acc_ref[...] += jnp.sum(d, axis=0, keepdims=True)
    else:
        acc_ref[...] += jnp.sum(d, axis=0, keepdims=True)

    @pl.when(i == pl.num_programs(1) - 1)
    def _():
        o_ref[...] = acc_ref[...].reshape(o_ref.shape)


def _rel_l1_elem_kernel(x_ref, y_ref, o_ref):
    """Elementwise |x-y| / (|x|+eps), computed in f32, stored in output dtype."""
    x = x_ref[...].astype(jnp.float32)
    y = y_ref[...].astype(jnp.float32)
    o_ref[...] = (jnp.abs(x - y) / (jnp.abs(x) + _EPS)).astype(o_ref.dtype)


@functools.partial(jax.jit, static_argnames=("size_average", "reduce"))
def rel_l1_loss(inp, target, size_average=True, reduce=True):
    assert inp.shape == target.shape, "input/target shapes must match"
    res_dtype = jnp.result_type(inp.dtype, target.dtype)
    n = inp.size
    rows = n // _LANES                   # lane-aligned prefix rows
    tail = n - rows * _LANES             # < 128 trailing elements (plain jnp)

    x_flat = inp.reshape(-1)
    y_flat = target.reshape(-1)

    if reduce:
        total = jnp.float32(0.0)
        if rows > 0:
            x = x_flat[:rows * _LANES].reshape(rows, _LANES)
            y = y_flat[:rows * _LANES].reshape(rows, _LANES)

            block_rows = min(_BLOCK_ROWS, rows)      # full-dim block if small
            num_blocks = pl.cdiv(rows, block_rows)
            n_split = 2 if num_blocks >= 2 else 1    # feeds both TCs on v7x
            bps = pl.cdiv(num_blocks, n_split)
            may_mask = (rows % block_rows != 0) or (n_split * bps != num_blocks)

            def in_map(s, i):
                # Clamp so an overhanging split never indexes past the slab;
                # the in-kernel mask zeroes any such (re-read) contribution.
                return (jnp.minimum(s * bps + i, num_blocks - 1), 0)

            kernel = functools.partial(
                _rel_l1_sum_kernel,
                block_rows=block_rows, blocks_per_split=bps,
                total_rows=rows, may_mask=may_mask)

            partials = pl.pallas_call(
                kernel,
                out_shape=jax.ShapeDtypeStruct((n_split, 1, _LANES), jnp.float32),
                grid_spec=pltpu.PrefetchScalarGridSpec(
                    num_scalar_prefetch=0,
                    grid=(n_split, bps),
                    in_specs=[
                        pl.BlockSpec((block_rows, _LANES), in_map),
                        pl.BlockSpec((block_rows, _LANES), in_map),
                    ],
                    out_specs=pl.BlockSpec((1, 1, _LANES), lambda s, i: (s, 0, 0)),
                    scratch_shapes=[pltpu.VMEM((1, _LANES), jnp.float32)],
                ),
                compiler_params=pltpu.CompilerParams(
                    dimension_semantics=("parallel", "arbitrary"),
                    vmem_limit_bytes=_VMEM_LIMIT,
                ),
            )(x, y)
            # Single tiny cross-lane reduce over (n_split, 1, 128) partials;
            # fuses with the tail add and the mean division into one XLA op.
            total = total + jnp.sum(partials)

        if tail:
            xt = x_flat[rows * _LANES:].astype(jnp.float32)
            yt = y_flat[rows * _LANES:].astype(jnp.float32)
            total = total + jnp.sum(jnp.abs(xt - yt) / (jnp.abs(xt) + _EPS))

        if size_average:
            total = total / jnp.float32(n)           # divide by true element count
        return total.astype(res_dtype)

    # ---- reduce=False: elementwise output, same shape/dtype as input. ----
    pieces = []
    if rows > 0:
        x = x_flat[:rows * _LANES].reshape(rows, _LANES)
        y = y_flat[:rows * _LANES].reshape(rows, _LANES)
        block_rows = min(_BLOCK_ROWS, rows)
        num_blocks = pl.cdiv(rows, block_rows)

        d_slab = pl.pallas_call(
            _rel_l1_elem_kernel,
            out_shape=jax.ShapeDtypeStruct((rows, _LANES), res_dtype),
            grid_spec=pltpu.PrefetchScalarGridSpec(
                num_scalar_prefetch=0,
                grid=(num_blocks,),
                in_specs=[
                    pl.BlockSpec((block_rows, _LANES), lambda i: (i, 0)),
                    pl.BlockSpec((block_rows, _LANES), lambda i: (i, 0)),
                ],
                out_specs=pl.BlockSpec((block_rows, _LANES), lambda i: (i, 0)),
            ),
            compiler_params=pltpu.CompilerParams(
                dimension_semantics=("parallel",),
                vmem_limit_bytes=_VMEM_LIMIT,
            ),
        )(x, y)
        pieces.append(d_slab.reshape(-1))

    if tail:
        xt = x_flat[rows * _LANES:].astype(jnp.float32)
        yt = y_flat[rows * _LANES:].astype(jnp.float32)
        pieces.append((jnp.abs(xt - yt) / (jnp.abs(xt) + _EPS)).astype(res_dtype))

    if not pieces:                                   # degenerate empty input
        return jnp.zeros(inp.shape, res_dtype)
    d_flat = pieces[0] if len(pieces) == 1 else jnp.concatenate(pieces)
    return d_flat.reshape(inp.shape)


if __name__ == "__main__":
    key = jax.random.PRNGKey(0)
    k1, k2 = jax.random.split(key)

    # NCHW, as in the PyTorch module usage.
    x = jax.random.normal(k1, (2, 4, 16, 16), dtype=jnp.float32)
    t = jax.random.normal(k2, (2, 4, 16, 16), dtype=jnp.float32)
    ref_elem = jnp.abs(x - t) / (jnp.abs(x) + _EPS)

    # Default module config: size_average=True, reduce=True -> mean.
    out = jax.block_until_ready(rel_l1_loss(x, t, size_average=True, reduce=True))
    assert jnp.allclose(out, jnp.mean(ref_elem), rtol=1e-5, atol=1e-5), out

    # Non-reduced path.
    out_elem = jax.block_until_ready(rel_l1_loss(x, t, reduce=False))
    assert out_elem.shape == x.shape
    assert jnp.allclose(out_elem, ref_elem, rtol=1e-5, atol=1e-6)

    # Sum path.
    out_sum = jax.block_until_ready(rel_l1_loss(x, t, size_average=False, reduce=True))
    assert jnp.allclose(out_sum, jnp.sum(ref_elem), rtol=1e-5, atol=1e-3)

    # Multi-block / core-split / masked-tail path (rows > block_rows).
    k3, k4 = jax.random.split(k2)
    xb = jax.random.normal(k3, (2, 4, 300, 300), dtype=jnp.float32)
    tb = jax.random.normal(k4, (2, 4, 300, 300), dtype=jnp.float32)
    ref_b = jnp.abs(xb - tb) / (jnp.abs(xb) + _EPS)
    out_b = jax.block_until_ready(rel_l1_loss(xb, tb))
    assert jnp.allclose(out_b, jnp.mean(ref_b), rtol=1e-3), (out_b, jnp.mean(ref_b))

    # Non-multiple-of-128 element count (aligned prefix + jnp tail path).
    xo = jax.random.normal(k3, (3, 5, 7, 11), dtype=jnp.float32)
    to = jax.random.normal(k4, (3, 5, 7, 11), dtype=jnp.float32)
    ref_o = jnp.abs(xo - to) / (jnp.abs(xo) + _EPS)
    out_o = jax.block_until_ready(rel_l1_loss(xo, to))
    assert jnp.allclose(out_o, jnp.mean(ref_o), rtol=1e-4), (out_o, jnp.mean(ref_o))
    out_oe = jax.block_until_ready(rel_l1_loss(xo, to, reduce=False))
    assert out_oe.shape == xo.shape
    assert jnp.allclose(out_oe, ref_o, rtol=1e-5, atol=1e-6)

    # Native sub-f32 dtype path (no wrapper-side casts; cast happens in-kernel).
    xh = x.astype(jnp.bfloat16)
    th = t.astype(jnp.bfloat16)
    ref_h = jnp.abs(xh.astype(jnp.float32) - th.astype(jnp.float32)) / (
        jnp.abs(xh.astype(jnp.float32)) + _EPS)
    out_h = jax.block_until_ready(rel_l1_loss(xh, th))
    assert jnp.allclose(jnp.float32(out_h), jnp.mean(ref_h), rtol=5e-2), out_h
    out_he = jax.block_until_ready(rel_l1_loss(xh, th, reduce=False))
    assert out_he.dtype == jnp.bfloat16 and out_he.shape == xh.shape

    print("KERNEL_OK")
</pallas_src>

<mosaic_0001>
module attributes {stable_mosaic.version = 11 : i64} {
  func.func @_rel_l1_sum_kernel(%arg0: i32, %arg1: i32, %arg2: memref<16x128xf32, #tpu.memory_space<vmem>>, %arg3: memref<16x128xf32, #tpu.memory_space<vmem>>, %arg4: memref<1x1x128xf32, #tpu.memory_space<vmem>>, %arg5: memref<1x128xf32, #tpu.memory_space<vmem>>) attributes {dimension_semantics = [#tpu.dimension_semantics<parallel>, #tpu.dimension_semantics<arbitrary>], iteration_bounds = array<i64: 1, 1>, scalar_prefetch = 0 : i64, scratch_operands = 1 : i64, tpu.core_type = #tpu.core_type<tc>, window_params = [{transform_indices = @transform_0, window_bounds = array<i64: 16, 128>}, {transform_indices = @transform_1, window_bounds = array<i64: 16, 128>}, {transform_indices = @transform_2, window_bounds = array<i64: 1, 1, 128>}]} {
    %c0_i32 = arith.constant 0 : i32
    %0 = arith.cmpi eq, %arg1, %c0_i32 : i32
    %1 = arith.extui %0 : i1 to i32
    %c0_i32_0 = arith.constant 0 : i32
    %2 = arith.cmpi ne, %1, %c0_i32_0 : i32
    scf.if %2 {
      %cst_11 = arith.constant 0.000000e+00 : f32
      %19 = vector.broadcast %cst_11 : f32 to vector<1x128xf32>
      %c0_12 = arith.constant 0 : index
      %c0_13 = arith.constant 0 : index
      %20 = vector.load %arg5[%c0_12, %c0_13] : memref<1x128xf32, #tpu.memory_space<vmem>>, vector<1x128xf32>
      tpu.vector_store %arg5[%c0_12, %c0_13], %19 {strides = array<i32>} : memref<1x128xf32, #tpu.memory_space<vmem>>, vector<1x128xf32>,
    } else {
    }
    %c0 = arith.constant 0 : index
    %c0_1 = arith.constant 0 : index
    %3 = vector.load %arg2[%c0, %c0_1] : memref<16x128xf32, #tpu.memory_space<vmem>>, vector<16x128xf32>
    %c0_2 = arith.constant 0 : index
    %c0_3 = arith.constant 0 : index
    %4 = vector.load %arg3[%c0_2, %c0_3] : memref<16x128xf32, #tpu.memory_space<vmem>>, vector<16x128xf32>
    %5 = arith.subf %3, %4 : vector<16x128xf32>
    %6 = math.absf %5 : vector<16x128xf32>
    %7 = math.absf %3 : vector<16x128xf32>
    %cst = arith.constant 9.99999974E-6 : f32
    %8 = vector.broadcast %cst : f32 to vector<16x128xf32>
    %9 = arith.addf %7, %8 : vector<16x128xf32>
    %10 = arith.divf %6, %9 : vector<16x128xf32>
    %c0_4 = arith.constant 0 : index
    %c0_5 = arith.constant 0 : index
    %11 = vector.load %arg5[%c0_4, %c0_5] : memref<1x128xf32, #tpu.memory_space<vmem>>, vector<1x128xf32>
    %cst_6 = arith.constant dense<0.000000e+00> : vector<128xf32>
    %12 = vector.multi_reduction <add>, %10, %cst_6 [0] : vector<16x128xf32> to vector<128xf32>
    %13 = vector.shape_cast %12 : vector<128xf32> to vector<1x128xf32>
    %14 = arith.addf %11, %13 : vector<1x128xf32>
    %c0_7 = arith.constant 0 : index
    %c0_8 = arith.constant 0 : index
    %15 = vector.load %arg5[%c0_7, %c0_8] : memref<1x128xf32, #tpu.memory_space<vmem>>, vector<1x128xf32>
    tpu.vector_store %arg5[%c0_7, %c0_8], %14 {strides = array<i32>} : memref<1x128xf32, #tpu.memory_space<vmem>>, vector<1x128xf32>,
    %c0_i32_9 = arith.constant 0 : i32
    %16 = arith.cmpi eq, %arg1, %c0_i32_9 : i32
    %17 = arith.extui %16 : i1 to i32
    %c0_i32_10 = arith.constant 0 : i32
    %18 = arith.cmpi ne, %17, %c0_i32_10 : i32
    scf.if %18 {
      %c0_11 = arith.constant 0 : index
      %c0_12 = arith.constant 0 : index
      %19 = vector.load %arg5[%c0_11, %c0_12] : memref<1x128xf32, #tpu.memory_space<vmem>>, vector<1x128xf32>
      %20 = vector.shape_cast %19 : vector<1x128xf32> to vector<1x1x128xf32>
      %c0_13 = arith.constant 0 : index
      %c0_14 = arith.constant 0 : index
      %c0_15 = arith.constant 0 : index
      %21 = vector.load %arg4[%c0_13, %c0_14, %c0_15] : memref<1x1x128xf32, #tpu.memory_space<vmem>>, vector<1x1x128xf32>
      tpu.vector_store %arg4[%c0_13, %c0_14, %c0_15], %20 {strides = array<i32>} : memref<1x1x128xf32, #tpu.memory_space<vmem>>, vector<1x1x128xf32>,
    } else {
    }
    return
  }
  func.func @transform_0(%arg0: i32, %arg1: i32) -> (i32, i32) {
    %c1_i32 = arith.constant 1 : i32
    %0 = arith.muli %arg0, %c1_i32 : i32
    %1 = arith.addi %0, %arg1 : i32
    %c0_i32 = arith.constant 0 : i32
    %2 = arith.minsi %1, %c0_i32 : i32
    %c0_i32_0 = arith.constant 0 : i32
    %c0_i32_1 = arith.constant 0 : i32
    return %2, %c0_i32_0 : i32, i32
  }
  func.func @transform_1(%arg0: i32, %arg1: i32) -> (i32, i32) {
    %c1_i32 = arith.constant 1 : i32
    %0 = arith.muli %arg0, %c1_i32 : i32
    %1 = arith.addi %0, %arg1 : i32
    %c0_i32 = arith.constant 0 : i32
    %2 = arith.minsi %1, %c0_i32 : i32
    %c0_i32_0 = arith.constant 0 : i32
    %c0_i32_1 = arith.constant 0 : i32
    return %2, %c0_i32_0 : i32, i32
  }
  func.func @transform_2(%arg0: i32, %arg1: i32) -> (i32, i32, i32) {
    %c0_i32 = arith.constant 0 : i32
    %c0_i32_0 = arith.constant 0 : i32
    %c0_i32_1 = arith.constant 0 : i32
    return %arg0, %c0_i32, %c0_i32_0 : i32, i32, i32
  }
}

</mosaic_0001>

<llo_original>
// kernel: rel_l1_loss.1
$region0: #{rel_l1_loss.1}
  #allocation0 [shape = 'u32[]', space=smem, size = 0x4, offset = 0x4, fixed_abs, tag = 'smem constant byte address 0x4 - core index']
  #allocation1 [shape = 'u32[144,128]{1,0:T(1,128)}', space=vmem, size = 0x12000, scoped, tag = 'internal scratch']
  #allocation2 [shape = 'f32[1,128]{1,0:T(1,128)}', space=vmem, size = 0x200, scoped, tag = 'scratch operand']
  %s0 = inlined_call_operand.vmem [shape: f32[16,128], index: 0, kind: input, shape index: {}]
  %s1 = inlined_call_operand.vmem [shape: f32[16,128], index: 1, kind: input, shape index: {}]
  %s2 = inlined_call_operand.vmem [shape: f32[1,1,128], index: 2, kind: output, shape index: {}]
  %s3 = sld [smem:[#allocation0]]
  $region26: #{rel_l1_loss.1} parent=0
    _
  %s5 = ssub.s32 1, %s3
  %s6 = scalar_select 0, %s5, %s3
  // Predicated region
  $region2: #{rel_l1_loss.1} parent=0 // pred_check
    _
  $region3: #{rel_l1_loss.1} parent=0 // pred_check_branch
    %8 = sbr.rel (0) target = $region5
  $region4: #{rel_l1_loss.1} parent=0 // pred_region
    %s9 = sadd.s32 0, 0
    %p10 = scmp.lt.s32.totalorder %s9, 0
    %s11 = scalar_select %p10, %s9, 0
    %s12 = smul.u32 2, %s11
    %p13 = scmp.lt.s32.totalorder %s12, 1
    %s14 = scalar_select %p13, %s12, 1
    %s15 = smul.addr %s14, 8
    %s16 = scalar_lea.vmem %s0, %s15
    %s17 = sadd.s32 0, 0
    %p18 = scmp.lt.s32.totalorder %s17, 0
    %s19 = scalar_select %p18, %s17, 0
    %s20 = smul.u32 2, %s19
  $region5: #{rel_l1_loss.1} parent=0 // pred_fallthru
    _
  // Predicated region
  $region6: #{rel_l1_loss.1} parent=0 // pred_check
    _
  $region7: #{rel_l1_loss.1} parent=0 // pred_check_branch
    %22 = sbr.rel (0) target = $region9
  $region8: #{rel_l1_loss.1} parent=0 // pred_region
    %s23 = sadd.s32 0, 0
    %p24 = scmp.lt.s32.totalorder %s23, 0
    %s25 = scalar_select %p24, %s23, 0
    %s26 = smul.u32 2, %s25
    %p27 = scmp.lt.s32.totalorder %s26, 1
    %s28 = scalar_select %p27, %s26, 1
    %s29 = smul.addr %s28, 8
    %s30 = scalar_lea.vmem %s1, %s29
    %s31 = sadd.s32 0, 0
    %p32 = scmp.lt.s32.totalorder %s31, 0
    %s33 = scalar_select %p32, %s31, 0
    %s34 = smul.u32 2, %s33
  $region9: #{rel_l1_loss.1} parent=0 // pred_fallthru
    _
  %s35 = sadd.s32 0, 0
  %p36 = scmp.lt.s32.totalorder %s35, 0
  %s37 = scalar_select %p36, %s35, 0
  %s38 = smul.u32 2, %s37
  %p39 = scmp.lt.s32.totalorder %s38, 1
  %s40 = scalar_select %p39, %s38, 1
  %s41 = smul.addr %s40, 8
  %s42 = scalar_lea.vmem %s0, %s41
  %s43 = sadd.s32 0, 0
  %p44 = scmp.lt.s32.totalorder %s43, 0
  %s45 = scalar_select %p44, %s43, 0
  %s46 = smul.u32 2, %s45
  %p47 = scmp.lt.s32.totalorder %s46, 1
  %s48 = scalar_select %p47, %s46, 1
  %s49 = smul.addr %s48, 8
  %s50 = scalar_lea.vmem %s1, %s49
  %s51 = sadd.s32 0, 0
  %p52 = scmp.lt.s32.totalorder %s51, 0
  %s53 = scalar_select %p52, %s51, 0
  %s54 = smul.u32 2, %s53
  %p55 = scmp.lt.s32.totalorder %s54, 1
  %s56 = scalar_select %p55, %s54, 1
  %s57 = smul.addr %s56, 8
  %s58 = scalar_lea.vmem %s0, %s57
  %s59 = sadd.s32 0, 0
  %p60 = scmp.lt.s32.totalorder %s59, 0
  %s61 = scalar_select %p60, %s59, 0
  %s62 = smul.u32 2, %s61
  %s63 = sadd.s32 0, 0
  %p64 = scmp.lt.s32.totalorder %s63, 0
  %s65 = scalar_select %p64, %s63, 0
  %s66 = smul.u32 2, %s65
  %p67 = scmp.lt.s32.totalorder %s66, 1
  %s68 = scalar_select %p67, %s66, 1
  %s69 = smul.addr %s68, 8
  %s70 = scalar_lea.vmem %s1, %s69
  %s71 = sadd.s32 0, 0
  %p72 = scmp.lt.s32.totalorder %s71, 0
  %s73 = scalar_select %p72, %s71, 0
  %s74 = smul.u32 2, %s73
  %p75 = scmp.eq.s32.totalorder 0, 0
  // Predicated region
  $region10: #{rel_l1_loss.1} parent=0 // pred_check
    %p76 = pneg %p75
  $region11: #{rel_l1_loss.1} parent=0 // pred_check_branch
    %78 = sbr.rel (%p76) target = $region13
  $region12: #{rel_l1_loss.1} parent=0 // pred_region
    %79 = vst [vmem:[#allocation2] sm:$0x1] 0.0
  $region13: #{rel_l1_loss.1} parent=0 // pred_fallthru
    _
  %v80 = vld [vmem:[%s58] sm:$0xff]
  %v81 = vld [vmem:[%s58 + $0x8] sm:$0xff]
  %v82 = vld [vmem:[%s70] sm:$0xff]
  %v83 = vld [vmem:[%s70 + $0x8] sm:$0xff]
  %v84 = vsub.f32 %v80, %v82
  %v85 = vsub.f32 %v81, %v83
  %v86 = vand.u32 2147483647, %v84
  %v87 = vand.u32 2147483647, %v85
  %v88 = vand.u32 2147483647, %v80
  %v89 = vand.u32 2147483647, %v81
  %v90 = vadd.f32 %v88, 1e-05
  %v91 = vadd.f32 %v89, 1e-05
  %v92 = vrcp.pop %v90
  %v93 = vmul.f32 %v86, %v92
  %v94 = vrcp.pop %v91
  %v95 = vmul.f32 %v87, %v94
  %v96 = vld [vmem:[#allocation2] sm:$0x1]
  %v97 = vadd.f32 %v93, %v95
  %v98 = vrot.slane %v97, 4
  %v99 = vadd.f32 %v97, %v98
  %v100 = vrot.slane %v99, 2
  %v101 = vadd.f32 %v99, %v100
  %v102 = vrot.slane %v101, 1
  %v103 = vadd.f32 %v101, %v102
  %v104 = vadd.f32 %v96, %v103
  %105 = vst [vmem:[#allocation2] sm:$0x1] %v104
  // Predicated region
  $region14: #{rel_l1_loss.1} parent=0 // pred_check
    %p106 = pneg %p75
  $region15: #{rel_l1_loss.1} parent=0 // pred_check_branch
    %108 = sbr.rel (%p106) target = $region17
  $region16: #{rel_l1_loss.1} parent=0 // pred_region
    %v109 = vld [vmem:[#allocation2] sm:$0x1]
    %110 = vst [vmem:[%s2] sm:$0x1] %v109
  $region17: #{rel_l1_loss.1} parent=0 // pred_fallthru
    _
  // Predicated region
  $region18: #{rel_l1_loss.1} parent=0 // pred_check
    _
  $region19: #{rel_l1_loss.1} parent=0 // pred_check_branch
    %112 = sbr.rel (0) target = $region21
  $region20: #{rel_l1_loss.1} parent=0 // pred_region
    _
  $region21: #{rel_l1_loss.1} parent=0 // pred_fallthru
    _
  // Predicated region
  $region22: #{rel_l1_loss.1} parent=0 // pred_check
    _
  $region23: #{rel_l1_loss.1} parent=0 // pred_check_branch
    %114 = sbr.rel (0) target = $region25
  $region24: #{rel_l1_loss.1} parent=0 // pred_region
    _
  $region25: #{rel_l1_loss.1} parent=0 // pred_fallthru
    _

</llo_original>
